<compile_context>
chip_gen: v7x
topology: tpu7x:2x2x1
jax: 0.10.0
libtpu: 0.0.40
codegen_flags: <defaults>
</compile_context>

<pallas_src>
import jax
import jax.numpy as jnp
from jax.experimental import pallas as pl
from jax.experimental.pallas import tpu as pltpu


# ---------------------------------------------------------------------------
# Production path: the identity needs no kernel at all.
# ---------------------------------------------------------------------------
def identity_map(x: jax.Array, *args, **kwargs) -> jax.Array:
    """Pallas-free equivalent of IdentityMap.forward(x, *args, **kwargs)."""
    del args, kwargs  # ignored, exactly like the PyTorch module
    return x


def identity_map_config():
    # Mirror of the `config` property.
    return {"mm_projector_type": "identity"}


# ---------------------------------------------------------------------------
# Optional explicit-copy Pallas kernel (for callers that need a fresh buffer).
# ---------------------------------------------------------------------------
_TILE_BYTES_TARGET = 8 * 1024 * 1024   # ~8 MiB per block (per perf review)
_VMEM_LIMIT_BYTES = 48 << 20           # 4 live buffers * 8 MiB = 32 MiB < 48 MiB
_MAX_LANE = 16 * 1024                  # cap on the lane-dense reshape width


def _identity_kernel(x_ref, o_ref):
    # Bit-exact copy of the current tile.
    o_ref[...] = x_ref[...]


def _copy_2d(x2: jax.Array) -> jax.Array:
    """Tiled HBM->HBM copy of a 2-D array via Pallas."""
    S, H = x2.shape
    itemsize = int(jnp.dtype(x2.dtype).itemsize)
    # Sublane packing: 8 rows for 4-byte dtypes, 16 for 2-byte, 32 for 1-byte.
    sublane = max(8, 32 // max(itemsize, 1))
    row_bytes = max(H * itemsize, 1)

    cost = pl.CostEstimate(
        flops=0, transcendentals=0, bytes_accessed=2 * S * H * itemsize)

    if row_bytes * sublane <= _TILE_BYTES_TARGET:
        # Common case: full hidden dim per block, 1-D grid over rows.
        tile_s = (_TILE_BYTES_TARGET // row_bytes) // sublane * sublane
        tile_s = max(tile_s, sublane)
        if tile_s >= S:
            tile_s = S  # full extent is always a legal block shape
        grid = (pl.cdiv(S, tile_s),)
        in_specs = [pl.BlockSpec((tile_s, H), lambda i: (i, 0))]
        out_specs = pl.BlockSpec((tile_s, H), lambda i: (i, 0))
        dim_sem = ("parallel",)
    else:
        # Very wide rows: split the lane axis in 128-multiple chunks so a
        # single block never exceeds the budget (guards v7x's 64 MiB VMEM).
        tile_s = min(S, sublane)
        tile_h = (_TILE_BYTES_TARGET // max(tile_s * itemsize, 1)) // 128 * 128
        tile_h = max(tile_h, 128)
        if tile_h >= H:
            tile_h = H
        grid = (pl.cdiv(S, tile_s), pl.cdiv(H, tile_h))
        in_specs = [pl.BlockSpec((tile_s, tile_h), lambda i, j: (i, j))]
        out_specs = pl.BlockSpec((tile_s, tile_h), lambda i, j: (i, j))
        dim_sem = ("parallel", "parallel")

    return pl.pallas_call(
        _identity_kernel,
        out_shape=jax.ShapeDtypeStruct((S, H), x2.dtype),
        grid=grid,
        in_specs=in_specs,
        out_specs=out_specs,
        cost_estimate=cost,
        compiler_params=pltpu.CompilerParams(
            dimension_semantics=dim_sem,
            vmem_limit_bytes=_VMEM_LIMIT_BYTES,
        ),
    )(x2)


def identity_map_pallas(x: jax.Array, *args, **kwargs) -> jax.Array:
    """Explicit Pallas copy with the same semantics as IdentityMap.forward."""
    del args, kwargs  # ignored, exactly like the PyTorch module

    if x.size == 0:
        return x

    orig_shape = x.shape
    n = x.size
    last = orig_shape[-1] if x.ndim >= 1 else 1

    if n % 128 == 0 and (x.ndim < 2 or last < 128 or last % 128 != 0):
        # Lane-dense reshape: widen the lane dimension to a large multiple of
        # 128 so stores are unmasked `vst` (biggest lever for copy kernels).
        lane = 128
        while n % (lane * 2) == 0 and lane * 2 <= _MAX_LANE:
            lane *= 2
        x2 = x.reshape(-1, lane)
    elif x.ndim >= 2:
        x2 = x.reshape(-1, last)
    else:
        x2 = x.reshape(1, -1)

    out2 = _copy_2d(x2)
    return out2.reshape(orig_shape)


if __name__ == "__main__":
    key = jax.random.PRNGKey(0)
    k0, k1, k2 = jax.random.split(key, 3)

    # Small shapes consistent with a projector input: (batch, seq, hidden).
    x_f32 = jax.random.normal(k0, (2, 8, 32), dtype=jnp.float32)
    x_bf16 = jax.random.normal(k1, (2, 16, 128), dtype=jnp.bfloat16)
    x_odd = jax.random.normal(k2, (3, 7, 5), dtype=jnp.float32)  # non-128 path

    # Production path: a true no-op, exactly like the PyTorch module.
    y0 = identity_map(x_f32, "ignored_positional_arg", some_kwarg=123)
    assert y0 is x_f32

    # Pallas explicit-copy path (run once on each dtype / layout case).
    y_f32 = jax.block_until_ready(identity_map_pallas(x_f32, "ignored", k=1))
    y_bf16 = jax.block_until_ready(identity_map_pallas(x_bf16))
    y_odd = jax.block_until_ready(identity_map_pallas(x_odd))

    assert y_f32.shape == x_f32.shape and y_f32.dtype == x_f32.dtype
    assert bool(jnp.array_equal(y_f32, x_f32))
    assert y_bf16.shape == x_bf16.shape and y_bf16.dtype == x_bf16.dtype
    assert bool(jnp.array_equal(y_bf16, x_bf16))
    assert y_odd.shape == x_odd.shape and bool(jnp.array_equal(y_odd, x_odd))
    assert identity_map_config() == {"mm_projector_type": "identity"}
    print("KERNEL_OK")
</pallas_src>

<mosaic_0001>
module attributes {stable_mosaic.version = 11 : i64} {
  func.func @_identity_kernel(%arg0: i32, %arg1: memref<1x512xf32, #tpu.memory_space<vmem>>, %arg2: memref<1x512xf32, #tpu.memory_space<vmem>>) attributes {dimension_semantics = [#tpu.dimension_semantics<parallel>], iteration_bounds = array<i64: 1>, scalar_prefetch = 0 : i64, scratch_operands = 0 : i64, tpu.core_type = #tpu.core_type<tc>, window_params = [{transform_indices = @transform_0, window_bounds = array<i64: 1, 512>}, {transform_indices = @transform_1, window_bounds = array<i64: 1, 512>}]} {
    %c0 = arith.constant 0 : index
    %c0_0 = arith.constant 0 : index
    %0 = vector.load %arg1[%c0, %c0_0] : memref<1x512xf32, #tpu.memory_space<vmem>>, vector<1x512xf32>
    %c0_1 = arith.constant 0 : index
    %c0_2 = arith.constant 0 : index
    %1 = vector.load %arg2[%c0_1, %c0_2] : memref<1x512xf32, #tpu.memory_space<vmem>>, vector<1x512xf32>
    tpu.vector_store %arg2[%c0_1, %c0_2], %0 {strides = array<i32>} : memref<1x512xf32, #tpu.memory_space<vmem>>, vector<1x512xf32>,
    return
  }
  func.func @transform_0(%arg0: i32) -> (i32, i32) {
    %c0_i32 = arith.constant 0 : i32
    %c0_i32_0 = arith.constant 0 : i32
    return %arg0, %c0_i32 : i32, i32
  }
  func.func @transform_1(%arg0: i32) -> (i32, i32) {
    %c0_i32 = arith.constant 0 : i32
    %c0_i32_0 = arith.constant 0 : i32
    return %arg0, %c0_i32 : i32, i32
  }
}

</mosaic_0001>

<llo_original>
// kernel: tpu_custom_call.1
$region0: #{tpu_custom_call.1}
  #allocation0 [shape = 'u32[]', space=smem, size = 0x4, offset = 0x4, fixed_abs, tag = 'smem constant byte address 0x4 - core index']
  #allocation1 [shape = 'u32[144,128]{1,0:T(1,128)}', space=vmem, size = 0x12000, scoped, tag = 'internal scratch']
  %s0 = inlined_call_operand.hbm [shape: f32[1,512], index: 0, kind: input, shape index: {}]
  %s1 = inlined_call_operand.hbm [shape: f32[1,512], index: 1, kind: output, shape index: {}]
  %s2 = sld [smem:[#allocation0]]
  $region18: #{tpu_custom_call.1} parent=0
    _
  %s4 = ssub.s32 1, %s2
  %s5 = scalar_select 0, %s4, %s2
  $region1: #{tpu_custom_call.1} parent=0
    #allocation2 [shape = 'u8[2048]{0}', space=vmem, size = 0x800, scoped, tag = 'input window, operand 0, single buffered']
    #allocation3 [shape = 's32[1]{0}', space=sflag, size = 0x4, scoped, tag = 'scoped memory for tpu_custom_call.1']
    #allocation4 [shape = 's32[1]{0}', space=sflag, size = 0x4, scoped, tag = 'scoped memory for tpu_custom_call.1']
    #allocation5 [shape = 'u8[2048]{0}', space=vmem, size = 0x800, scoped, tag = 'output window, operand 0, single buffered']
    %6 = vsyncpa [#allocation3], 0
    %7 = vsyncpa [#allocation4], 0
    // Predicated region
    $region2: #{tpu_custom_call.1} parent=1 // pred_check
      _
    $region3: #{tpu_custom_call.1} parent=1 // pred_check_branch
      %9 = sbr.rel (0) target = $region5
    $region4: #{tpu_custom_call.1} parent=1 // pred_region
      %s11 = ssub.s32 64, 64
      %12 = vsyncadd [#allocation3], %s11
      %s14 = sshll.u32 [#allocation2], 4
      %s15 = int_to_ptr.vmem [resolvable:$true] %s14
      %17 = dma.hbm_to_vmem [thread:$0]  %s0, 64, %s15, [#allocation3]
    $region5: #{tpu_custom_call.1} parent=1 // pred_fallthru
      _
    // Predicated region
    $region6: #{tpu_custom_call.1} parent=1 // pred_check
      _
    $region7: #{tpu_custom_call.1} parent=1 // pred_check_branch
      %19 = sbr.rel (0) target = $region9
    $region8: #{tpu_custom_call.1} parent=1 // pred_region
      %20 = dma.done [#allocation3], 64
    $region9: #{tpu_custom_call.1} parent=1 // pred_fallthru
      _
    %v21 = vld [vmem:[#allocation2] sm:$0xf]
    %v22 = vlaneseq
    %vm23 = vcmp.ge.s32.totalorder %v22, 0
    %vm24 = vcmp.lt.s32.totalorder %v22, 512
    %vm25 = vmand %vm23, %vm24
    %26 = vst.msk [vmem:[#allocation5] sm:$0xf] %vm25, %v21
    // Predicated region
    $region10: #{tpu_custom_call.1} parent=1 // pred_check
      _
    $region11: #{tpu_custom_call.1} parent=1 // pred_check_branch
      %28 = sbr.rel (0) target = $region13
    $region12: #{tpu_custom_call.1} parent=1 // pred_region
      %s30 = ssub.s32 64, 64
      %31 = vsyncadd [#allocation4], %s30
      %s33 = sshll.u32 [#allocation5], 4
      %s34 = int_to_ptr.vmem [resolvable:$true] %s33
      %36 = dma.vmem_to_hbm [thread:$0]  %s34, 64, %s1, [#allocation4]
    $region13: #{tpu_custom_call.1} parent=1 // pred_fallthru
      _
    // Predicated region
    $region14: #{tpu_custom_call.1} parent=1 // pred_check
      _
    $region15: #{tpu_custom_call.1} parent=1 // pred_check_branch
      %38 = sbr.rel (0) target = $region17
    $region16: #{tpu_custom_call.1} parent=1 // pred_region
      %39 = dma.done [#allocation4], 64
    $region17: #{tpu_custom_call.1} parent=1 // pred_fallthru
      _
    %40 = vsyncpa [#allocation3], 1
    %41 = vsyncpa [#allocation4], 1

</llo_original>
